<compile_context>
chip_gen: v5e
topology: v5e:2x2
jax: 0.10.0
libtpu: 0.0.40
codegen_flags: <defaults>
</compile_context>

<pallas_src>
import functools
from abc import abstractmethod
from typing import Union

import jax
import jax.numpy as jnp
from jax import lax
from jax.experimental import pallas as pl
from jax.experimental.pallas import tpu as pltpu


class BaseLoss:
    """
    Base class for all losses (faithful translation of the PyTorch module).
    """

    def __init__(self, **batch):
        super().__init__()
        # No parameters are created in the reference module.

    @abstractmethod
    def forward(self, **batch) -> Union[jax.Array, dict]:
        """
        Forward pass logic.
        Can return a jax.Array (interpreted as loss) or a dict.
        """
        # TODO(synk): forward() is abstract in the reference module; there is
        # no concrete computation to lower to Pallas for the base class.
        raise NotImplementedError()

    def __call__(self, **batch):
        return self.forward(**batch)


# ----------------------------------------------------------------------------
# Pallas reduction kernel (the canonical "loss" hot path for subclasses).
# ----------------------------------------------------------------------------
_LANE = 128
_SUBLANE = 8
_DEFAULT_TILE_BYTES = 4 * 1024 * 1024        # ~4 MiB per input tile
_DEFAULT_MIN_PALLAS_ELEMENTS = 64 * 1024     # below this, plain fused XLA wins
_VMEM_LIMIT_BYTES = 48 * 1024 * 1024         # safe on v7x's 64 MiB VMEM


def _round_down(x: int, m: int) -> int:
    return (x // m) * m


def _sq_diff_partial_kernel(pred_ref, tgt_ref, out_ref, *,
                            total_rows, tile_rows, num_blocks):
    # Tile is (tile_rows, 128) in the storage dtype; widen in-register only.
    d = pred_ref[...].astype(jnp.float32) - tgt_ref[...].astype(jnp.float32)
    d2 = d * d
    if total_rows != num_blocks * tile_rows:
        # Last block is a padded edge block: its out-of-bounds rows contain
        # unspecified values (possibly NaN/Inf).  Mask d^2 before the reduce;
        # jnp.where discards NaN/Inf from the unselected branch.
        limit = total_rows - pl.program_id(0) * tile_rows
        row_id = lax.broadcasted_iota(jnp.int32, d2.shape, 0)
        d2 = jnp.where(row_id < limit, d2, 0.0)
    # Fold sublane groups: (tile_rows, 128) -> (tile_rows//8, 8, 128) and sum
    # the leading axis.  Pure vreg adds on the VPU (no XLU cross-lane work).
    out_ref[0] = jnp.sum(
        d2.reshape(tile_rows // _SUBLANE, _SUBLANE, _LANE), axis=0)


def _plain_sum_sq_diff(pred: jax.Array, target: jax.Array) -> jax.Array:
    d = pred.astype(jnp.float32) - target.astype(jnp.float32)
    return jnp.sum(d * d)


def _pallas_sum_sq_diff(pred: jax.Array, target: jax.Array, *,
                        max_tile_bytes: int = _DEFAULT_TILE_BYTES) -> jax.Array:
    """Sum((pred - target)^2) over all elements, computed tile-by-tile."""
    assert pred.shape == target.shape, (pred.shape, target.shape)
    n = pred.size

    p = pred.reshape(-1)
    t = target.reshape(-1)

    # Lane-dense layout.  If the flat size is already a multiple of 128 (the
    # common ML case) the reshapes below are free bitcasts: zero HBM copies.
    lane_pad = (-n) % _LANE
    if lane_pad:
        # TODO(synk): this pad copies both inputs through HBM once; it is only
        # taken for shapes whose total size is not a multiple of 128.  Zero
        # padding on both inputs -> diff is 0 -> contributes 0 to the sum.
        p = jnp.pad(p, (0, lane_pad))
        t = jnp.pad(t, (0, lane_pad))
    rows = (n + lane_pad) // _LANE

    itemsize = max(jnp.dtype(pred.dtype).itemsize,
                   jnp.dtype(target.dtype).itemsize)
    # Packed sublane multiple: 8 for 32-bit, 16 for bf16/f16, 32 for 8-bit.
    sub = max(_SUBLANE, 32 // itemsize)
    if rows < sub:
        # Degenerate tiny input: not worth a kernel launch.
        return _plain_sum_sq_diff(pred, target)

    # ~max_tile_bytes per input tile, never larger than the array, rounded to
    # the packed sublane multiple (keeps DMA and vreg loads unmasked).
    tile_rows = max(sub, min(max_tile_bytes // (_LANE * itemsize), rows))
    tile_rows = max(sub, _round_down(tile_rows, sub))
    num_blocks = pl.cdiv(rows, tile_rows)

    p2 = p.reshape(rows, _LANE)
    t2 = t.reshape(rows, _LANE)

    kernel = functools.partial(
        _sq_diff_partial_kernel,
        total_rows=rows, tile_rows=tile_rows, num_blocks=num_blocks)

    out_bytes = num_blocks * _SUBLANE * _LANE * 4
    partials = pl.pallas_call(
        kernel,
        out_shape=jax.ShapeDtypeStruct((num_blocks, _SUBLANE, _LANE), jnp.float32),
        grid=(num_blocks,),
        in_specs=[
            pl.BlockSpec((tile_rows, _LANE), lambda i: (i, 0)),
            pl.BlockSpec((tile_rows, _LANE), lambda i: (i, 0)),
        ],
        out_specs=pl.BlockSpec((1, _SUBLANE, _LANE), lambda i: (i, 0, 0)),
        compiler_params=pltpu.CompilerParams(
            dimension_semantics=("parallel",),   # independent blocks: megacore
            vmem_limit_bytes=_VMEM_LIMIT_BYTES,
        ),
        cost_estimate=pl.CostEstimate(
            flops=3 * n,
            transcendentals=0,
            bytes_accessed=int(p2.nbytes) + int(t2.nbytes) + int(out_bytes),
        ),
    )(p2, t2)

    # Tiny epilogue reduce done in plain JAX (partials are lane-dense f32).
    return jnp.sum(partials)


def pallas_mse(pred: jax.Array, target: jax.Array, *,
               min_pallas_elements: int = _DEFAULT_MIN_PALLAS_ELEMENTS,
               max_tile_bytes: int = _DEFAULT_TILE_BYTES) -> jax.Array:
    n = pred.size
    if n < min_pallas_elements:
        # Small-input fast path: fused XLA elementwise + reduce, no launch.
        d = pred.astype(jnp.float32) - target.astype(jnp.float32)
        return jnp.mean(d * d)
    # Single divide (multiply by precomputed 1/N) at finalize, not per tile.
    return _pallas_sum_sq_diff(
        pred, target, max_tile_bytes=max_tile_bytes) * (1.0 / n)


class PallasMSELoss(BaseLoss):
    """Minimal concrete subclass demonstrating the Pallas-backed hot path."""

    def __init__(self, *,
                 min_pallas_elements: int = _DEFAULT_MIN_PALLAS_ELEMENTS,
                 max_tile_bytes: int = _DEFAULT_TILE_BYTES,
                 **batch):
        super().__init__(**batch)
        self._min_pallas_elements = min_pallas_elements
        self._max_tile_bytes = max_tile_bytes

    def forward(self, *, pred, target, **batch) -> jax.Array:
        return pallas_mse(pred, target,
                          min_pallas_elements=self._min_pallas_elements,
                          max_tile_bytes=self._max_tile_bytes)


if __name__ == "__main__":
    key = jax.random.PRNGKey(0)
    ks = jax.random.split(key, 12)

    # Faithful base-class behavior: forward is abstract.
    base = BaseLoss()
    try:
        base.forward()
        raise AssertionError("BaseLoss.forward should raise NotImplementedError")
    except NotImplementedError:
        pass

    loss_fn = PallasMSELoss()

    def ref_mse(p, t):
        return jnp.mean((p.astype(jnp.float32) - t.astype(jnp.float32)) ** 2)

    # Case 1: small f32 shape -> fast path through forward().
    p1 = jax.random.normal(ks[0], (8, 128), dtype=jnp.float32)
    t1 = jax.random.normal(ks[1], (8, 128), dtype=jnp.float32)
    l1 = loss_fn(pred=p1, target=t1)
    jax.block_until_ready(l1)
    assert jnp.allclose(l1, ref_mse(p1, t1), atol=1e-5, rtol=1e-5), (l1,)

    # Case 2: awkward tiny shape -> fast path through forward().
    p2 = jax.random.normal(ks[2], (5, 37), dtype=jnp.float32)
    t2 = jax.random.normal(ks[3], (5, 37), dtype=jnp.float32)
    l2 = loss_fn(pred=p2, target=t2)
    jax.block_until_ready(l2)
    assert jnp.allclose(l2, ref_mse(p2, t2), atol=1e-5, rtol=1e-5), (l2,)

    # Case 3: Pallas path, lane-aligned, forced small tiles -> 4 exact blocks.
    p3 = jax.random.normal(ks[4], (256, 256), dtype=jnp.float32)
    t3 = jax.random.normal(ks[5], (256, 256), dtype=jnp.float32)
    l3 = pallas_mse(p3, t3, min_pallas_elements=0, max_tile_bytes=64 * 1024)
    jax.block_until_ready(l3)
    assert jnp.allclose(l3, ref_mse(p3, t3), atol=1e-5, rtol=1e-5), (l3,)

    # Case 4: Pallas path, non-128-multiple size + ragged last block (5 blocks,
    # last block only partially valid -> exercises the in-kernel row mask).
    p4 = jax.random.normal(ks[6], (300, 250), dtype=jnp.float32)
    t4 = jax.random.normal(ks[7], (300, 250), dtype=jnp.float32)
    l4 = pallas_mse(p4, t4, min_pallas_elements=0, max_tile_bytes=64 * 1024)
    jax.block_until_ready(l4)
    assert jnp.allclose(l4, ref_mse(p4, t4), atol=1e-5, rtol=1e-5), (l4,)

    # Case 5: bf16 storage dtype through DMA (16-row packed sublane multiple),
    # 2 blocks with a ragged last block.
    p5 = jax.random.normal(ks[8], (128, 384), dtype=jnp.bfloat16)
    t5 = jax.random.normal(ks[9], (128, 384), dtype=jnp.bfloat16)
    l5 = pallas_mse(p5, t5, min_pallas_elements=0, max_tile_bytes=64 * 1024)
    jax.block_until_ready(l5)
    assert jnp.allclose(l5, ref_mse(p5, t5), atol=1e-3, rtol=1e-3), (l5,)

    # Case 6: default configuration (~4 MiB tiles) through forward();
    # copy-free wrapper (size is a multiple of 128 -> reshape is a bitcast).
    p6 = jax.random.normal(ks[10], (512, 256), dtype=jnp.float32)
    t6 = jax.random.normal(ks[11], (512, 256), dtype=jnp.float32)
    l6 = loss_fn(pred=p6, target=t6)
    jax.block_until_ready(l6)
    assert jnp.allclose(l6, ref_mse(p6, t6), atol=1e-5, rtol=1e-5), (l6,)

    print("KERNEL_OK")
</pallas_src>

<mosaic_0001>
module attributes {stable_mosaic.version = 11 : i64} {
  func.func @_sq_diff_partial_kernel(%arg0: i32, %arg1: memref<128x128xf32, #tpu.memory_space<vmem>>, %arg2: memref<128x128xf32, #tpu.memory_space<vmem>>, %arg3: memref<1x8x128xf32, #tpu.memory_space<vmem>>) attributes {dimension_semantics = [#tpu.dimension_semantics<parallel>], iteration_bounds = array<i64: 4>, scalar_prefetch = 0 : i64, scratch_operands = 0 : i64, tpu.core_type = #tpu.core_type<tc>, window_params = [{transform_indices = @transform_0, window_bounds = array<i64: 128, 128>}, {transform_indices = @transform_1, window_bounds = array<i64: 128, 128>}, {transform_indices = @transform_2, window_bounds = array<i64: 1, 8, 128>}]} {
    %c0 = arith.constant 0 : index
    %c0_0 = arith.constant 0 : index
    %0 = vector.load %arg1[%c0, %c0_0] : memref<128x128xf32, #tpu.memory_space<vmem>>, vector<128x128xf32>
    %c0_1 = arith.constant 0 : index
    %c0_2 = arith.constant 0 : index
    %1 = vector.load %arg2[%c0_1, %c0_2] : memref<128x128xf32, #tpu.memory_space<vmem>>, vector<128x128xf32>
    %2 = arith.subf %0, %1 : vector<128x128xf32>
    %3 = arith.mulf %2, %2 : vector<128x128xf32>
    %4 = vector.shape_cast %3 : vector<128x128xf32> to vector<16x8x128xf32>
    %cst = arith.constant dense<0.000000e+00> : vector<8x128xf32>
    %5 = vector.multi_reduction <add>, %4, %cst [0] : vector<16x8x128xf32> to vector<8x128xf32>
    %c0_3 = arith.constant 0 : index
    %c0_4 = arith.constant 0 : index
    %c0_5 = arith.constant 0 : index
    %6 = vector.load %arg3[%c0_3, %c0_4, %c0_5] : memref<1x8x128xf32, #tpu.memory_space<vmem>>, vector<1x8x128xf32>
    %7 = vector.shape_cast %6 : vector<1x8x128xf32> to vector<8x128xf32>
    %8 = vector.shape_cast %5 : vector<8x128xf32> to vector<1x8x128xf32>
    tpu.vector_store %arg3[%c0_3, %c0_4, %c0_5], %8 {strides = array<i32>} : memref<1x8x128xf32, #tpu.memory_space<vmem>>, vector<1x8x128xf32>,
    return
  }
  func.func @transform_0(%arg0: i32) -> (i32, i32) {
    %c0_i32 = arith.constant 0 : i32
    %c0_i32_0 = arith.constant 0 : i32
    return %arg0, %c0_i32 : i32, i32
  }
  func.func @transform_1(%arg0: i32) -> (i32, i32) {
    %c0_i32 = arith.constant 0 : i32
    %c0_i32_0 = arith.constant 0 : i32
    return %arg0, %c0_i32 : i32, i32
  }
  func.func @transform_2(%arg0: i32) -> (i32, i32, i32) {
    %c0_i32 = arith.constant 0 : i32
    %c0_i32_0 = arith.constant 0 : i32
    %c0_i32_1 = arith.constant 0 : i32
    return %arg0, %c0_i32, %c0_i32_0 : i32, i32, i32
  }
}

</mosaic_0001>

<llo_original>
// kernel: tpu_custom_call.1
$region0: #{tpu_custom_call.1}
  #allocation0 [shape = 'u32[]', space=smem, size = 0x4, offset = 0x4, fixed_abs, tag = 'smem constant byte address 0x4 - core index']
  #allocation1 [shape = 'u32[72,128]{1,0:T(1,128)}', space=vmem, size = 0x9000, scoped, tag = 'internal scratch']
  %s0 = inlined_call_operand.hbm [shape: f32[512,128], index: 0, kind: input, shape index: {}]
  %s1 = inlined_call_operand.hbm [shape: f32[512,128], index: 1, kind: input, shape index: {}]
  %s2 = inlined_call_operand.hbm [shape: f32[4,8,128], index: 2, kind: output, shape index: {}]
  %s3 = sld [smem:[#allocation0]]
  $region49: #{tpu_custom_call.1} parent=0
    _
  %s5 = ssub.s32 1, %s3
  %s6 = scalar_select 0, %s5, %s3
  $region1: #{tpu_custom_call.1} parent=0
    #allocation2 [shape = 'u8[131072]{0}', space=vmem, size = 0x20000, scoped, tag = 'input window, operand 0']
    #allocation3 [shape = 's32[2]{0}', space=sflag, size = 0x8, scoped, tag = 'scoped memory for tpu_custom_call.1']
    #allocation4 [shape = 's32[2]{0}', space=sflag, size = 0x8, scoped, tag = 'scoped memory for tpu_custom_call.1']
    #allocation5 [shape = 'u8[131072]{0}', space=vmem, size = 0x20000, scoped, tag = 'input window, operand 1']
    #allocation6 [shape = 's32[2]{0}', space=sflag, size = 0x8, scoped, tag = 'scoped memory for tpu_custom_call.1']
    #allocation7 [shape = 'u8[8192]{0}', space=vmem, size = 0x2000, scoped, tag = 'output window, operand 0']
    %7 = vsyncpa [#allocation3], 0
    %s8 = scalar_lea.sflag [#allocation3], 1
    %9 = vsyncpa %s8, 0
    %10 = vsyncpa [#allocation6], 0
    %s11 = scalar_lea.sflag [#allocation6], 1
    %12 = vsyncpa %s11, 0
    %13 = vsyncpa [#allocation4], 0
    %s14 = scalar_lea.sflag [#allocation4], 1
    %15 = vsyncpa %s14, 0
    loop: start=0, step=1, limit=6
    $region2: #{tpu_custom_call.1} parent=1 // loop_pre_header
      _
    $region3: #{tpu_custom_call.1} parent=1 // loop_header
      %s17 = sphi 0, %s21
      %p18 = scmp.ge.s32.totalorder %s17, 6
      %s27 = sphi 0, %s29
      %s30 = sphi 0, %s27
      %s31 = sphi 0, %s30
      %s47 = sphi 0, %s31
      %s53 = sphi 0, %s55
      %s56 = sphi 0, %s53
      %s57 = sphi 0, %s56
      %s73 = sphi 0, %s57
      %s79 = sphi 0, %s81
      %s82 = sphi 0, %s79
      %s83 = sphi 0, %s82
      %s99 = sphi 0, %s83
    $region4: #{tpu_custom_call.1} parent=1 // loop_header_branch
      %20 = sbr.rel (%p18) target = $region8
    $region5: #{tpu_custom_call.1} parent=1 // loop_body
      %s22 = ssub.s32 %s17, 1
      %s23 = ssub.s32 %s17, 2
      %s24 = sadd.s32 %s17, 1
      %s25 = ssub.s32 %s17, %s24
      %p26 = scmp.eq.s32.totalorder %s25, 0
      %s28 = sadd.s32 %s27, 1
      %s29 = scalar_select %p26, %s27, %s28
      %p32 = pneg %p26
      %p33 = scmp.eq.s32.totalorder %s17, 3
      %p34 = por %p32, %p33
      %p35 = scmp.ne.s32.totalorder %s27, %s30
      %p36 = scmp.eq.s32.totalorder %s17, 0
      %p37 = por %p35, %p36
      %p38 = scmp.ne.s32.totalorder %s27, %s30
      %p39 = scmp.eq.s32.totalorder %s22, 3
      %p40 = por %p38, %p39
      %p41 = scmp.ne.s32.totalorder %s30, %s31
      %p42 = scmp.eq.s32.totalorder %s22, 0
      %p43 = por %p41, %p42
      %p44 = scmp.ne.s32.totalorder %s30, %s31
      %p45 = scmp.eq.s32.totalorder %s23, 3
      %p46 = por %p44, %p45
      %p48 = scmp.ne.s32.totalorder %s31, %s47
      %p49 = scmp.eq.s32.totalorder %s23, 0
      %p50 = por %p48, %p49
      %s51 = ssub.s32 %s17, %s24
      %p52 = scmp.eq.s32.totalorder %s51, 0
      %s54 = sadd.s32 %s53, 1
      %s55 = scalar_select %p52, %s53, %s54
      %p58 = pneg %p52
      %p59 = scmp.eq.s32.totalorder %s17, 3
      %p60 = por %p58, %p59
      %p61 = scmp.ne.s32.totalorder %s53, %s56
      %p62 = scmp.eq.s32.totalorder %s17, 0
      %p63 = por %p61, %p62
      %p64 = scmp.ne.s32.totalorder %s53, %s56
      %p65 = scmp.eq.s32.totalorder %s22, 3
      %p66 = por %p64, %p65
      %p67 = scmp.ne.s32.totalorder %s56, %s57
      %p68 = scmp.eq.s32.totalorder %s22, 0
      %p69 = por %p67, %p68
      %p70 = scmp.ne.s32.totalorder %s56, %s57
      %p71 = scmp.eq.s32.totalorder %s23, 3
      %p72 = por %p70, %p71
      %p74 = scmp.ne.s32.totalorder %s57, %s73
      %p75 = scmp.eq.s32.totalorder %s23, 0
      %p76 = por %p74, %p75
      %s77 = ssub.s32 %s17, %s24
      %p78 = scmp.eq.s32.totalorder %s77, 0
      %s80 = sadd.s32 %s79, 1
      %s81 = scalar_select %p78, %s79, %s80
      %p84 = pneg %p78
      %p85 = scmp.eq.s32.totalorder %s17, 3
      %p86 = por %p84, %p85
      %p87 = scmp.ne.s32.totalorder %s79, %s82
      %p88 = scmp.eq.s32.totalorder %s17, 0
      %p89 = por %p87, %p88
      %p90 = scmp.ne.s32.totalorder %s79, %s82
      %p91 = scmp.eq.s32.totalorder %s22, 3
      %p92 = por %p90, %p91
      %p93 = scmp.ne.s32.totalorder %s82, %s83
      %p94 = scmp.eq.s32.totalorder %s22, 0
      %p95 = por %p93, %p94
      %p96 = scmp.ne.s32.totalorder %s82, %s83
      %p97 = scmp.eq.s32.totalorder %s23, 3
      %p98 = por %p96, %p97
      %p100 = scmp.ne.s32.totalorder %s83, %s99
      %p101 = scmp.eq.s32.totalorder %s23, 0
      %p102 = por %p100, %p101
      %p103 = scmp.le.s32.totalorder 1, %s17
      %p104 = scmp.lt.s32.totalorder %s17, 5
      %p105 = pnand %p103, %p104
      %p106 = pneg %p105
      // Predicated region
      $region9: #{tpu_custom_call.1} parent=5 // pred_check
        _
      $region10: #{tpu_custom_call.1} parent=5 // pred_check_branch
        %108 = sbr.rel (%p105) target = $region12
      $region11: #{tpu_custom_call.1} parent=5 // pred_region
        %s109 = ssub.s32 %s17, 1
      $region12: #{tpu_custom_call.1} parent=5 // pred_fallthru
        _
      %p110 = scmp.lt.s32.totalorder %s17, 4
      // Predicated region
      $region13: #{tpu_custom_call.1} parent=5 // pred_check
        %p111 = pneg %p110
      $region14: #{tpu_custom_call.1} parent=5 // pred_check_branch
        %113 = sbr.rel (%p111) target = $region16
      $region15: #{tpu_custom_call.1} parent=5 // pred_region
        // Predicated region
        $region17: #{tpu_custom_call.1} parent=15 // pred_check
          %p114 = pneg %p37
        $region18: #{tpu_custom_call.1} parent=15 // pred_check_branch
          %116 = sbr.rel (%p114) target = $region20
        $region19: #{tpu_custom_call.1} parent=15 // pred_region
          %s117 = sand.u32 %s27, 1
          %s118 = scalar_lea.sflag [#allocation3], %s117
          %s119 = sand.u32 %s27, 1
          %s120 = smul.addr %s119, 128
          %s121 = scalar_lea.vmem [#allocation2], %s120
          %s122 = smul.u32 16, %s17
          %124 = vsyncadd %s118, 0
          %s125 = smul.addr %s122, 8
          %s126 = scalar_lea.hbm %s0, %s125
          %s127 = sshll.u32 %s126, 4
          %s128 = int_to_ptr.hbm [resolvable:$true] %s127
          %s129 = sshll.u32 %s121, 4
          %s130 = int_to_ptr.vmem [resolvable:$true] %s129
          %135 = dma.hbm_to_vmem [thread:$0]  %s128, 2048, %s130, %s118, 128, 128, 8
        $region20: #{tpu_custom_call.1} parent=15 // pred_fallthru
          _
        // Predicated region
        $region21: #{tpu_custom_call.1} parent=15 // pred_check
          %p136 = pneg %p63
        $region22: #{tpu_custom_call.1} parent=15 // pred_check_branch
          %138 = sbr.rel (%p136) target = $region24
        $region23: #{tpu_custom_call.1} parent=15 // pred_region
          %s139 = sand.u32 %s53, 1
          %s140 = scalar_lea.sflag [#allocation6], %s139
          %s141 = sand.u32 %s53, 1
          %s142 = smul.addr %s141, 128
          %s143 = scalar_lea.vmem [#allocation5], %s142
          %s144 = smul.u32 16, %s17
          %146 = vsyncadd %s140, 0
          %s147 = smul.addr %s144, 8
          %s148 = scalar_lea.hbm %s1, %s147
          %s149 = sshll.u32 %s148, 4
          %s150 = int_to_ptr.hbm [resolvable:$true] %s149
          %s151 = sshll.u32 %s143, 4
          %s152 = int_to_ptr.vmem [resolvable:$true] %s151
          %157 = dma.hbm_to_vmem [thread:$0]  %s150, 2048, %s152, %s140, 128, 128, 8
        $region24: #{tpu_custom_call.1} parent=15 // pred_fallthru
          _
      $region16: #{tpu_custom_call.1} parent=5 // pred_fallthru
        _
      %p158 = scmp.le.s32.totalorder 1, %s17
      %p159 = scmp.lt.s32.totalorder %s17, 5
      %p160 = pnand %p158, %p159
      %p161 = pneg %p160
      // Predicated region
      $region25: #{tpu_custom_call.1} parent=5 // pred_check
        _
      $region26: #{tpu_custom_call.1} parent=5 // pred_check_branch
        %163 = sbr.rel (%p160) target = $region28
      $region27: #{tpu_custom_call.1} parent=5 // pred_region
        %s164 = ssub.s32 %s17, 1
        %s165 = sand.u32 %s30, 1
        %s166 = scalar_lea.sflag [#allocation3], %s165
        %s167 = sand.u32 %s30, 1
        %s168 = smul.addr %s167, 128
        %s169 = scalar_lea.vmem [#allocation2], %s168
        // Predicated region
        $region29: #{tpu_custom_call.1} parent=27 // pred_check
          %p170 = pneg %p43
        $region30: #{tpu_custom_call.1} parent=27 // pred_check_branch
          %172 = sbr.rel (%p170) target = $region32
        $region31: #{tpu_custom_call.1} parent=27 // pred_region
          %174 = dma.done %s166, 2048
        $region32: #{tpu_custom_call.1} parent=27 // pred_fallthru
          _
        %s175 = sand.u32 %s56, 1
        %s176 = scalar_lea.sflag [#allocation6], %s175
        %s177 = sand.u32 %s56, 1
        %s178 = smul.addr %s177, 128
        %s179 = scalar_lea.vmem [#allocation5], %s178
        // Predicated region
        $region33: #{tpu_custom_call.1} parent=27 // pred_check
          %p180 = pneg %p69
        $region34: #{tpu_custom_call.1} parent=27 // pred_check_branch
          %182 = sbr.rel (%p180) target = $region36
        $region35: #{tpu_custom_call.1} parent=27 // pred_region
          %184 = dma.done %s176, 2048
        $region36: #{tpu_custom_call.1} parent=27 // pred_fallthru
          _
        %s185 = sand.u32 %s30, 1
        %s186 = scalar_lea.sflag [#allocation3], %s185
        %s187 = sand.u32 %s30, 1
        %s188 = smul.addr %s187, 128
        %s189 = scalar_lea.vmem [#allocation2], %s188
        %p190 = pneg %p43
        %p191 = pneg %p40
        %s192 = sand.u32 %s56, 1
        %s193 = scalar_lea.sflag [#allocation6], %s192
        %s194 = sand.u32 %s56, 1
        %s195 = smul.addr %s194, 128
        %s196 = scalar_lea.vmem [#allocation5], %s195
        %p197 = pneg %p69
        %p198 = pneg %p66
        %p199 = pneg %p95
        %p200 = pneg %p92
        %s201 = sand.u32 %s82, 1
        %s202 = scalar_lea.sflag [#allocation4], %s201
        %s203 = sand.u32 %s82, 1
        %s204 = smul.addr %s203, 8
        %s205 = scalar_lea.vmem [#allocation7], %s204
        %s206 = smul.u32 16, %s22
        %s207 = smul.u32 16, %s22
        %v208 = vld [vmem:[%s169] sm:$0xff]
        %v209 = vld [vmem:[%s169 + $0x8] sm:$0xff]
        %v210 = vld [vmem:[%s169 + $0x10] sm:$0xff]
        %v211 = vld [vmem:[%s169 + $0x18] sm:$0xff]
        %v212 = vld [vmem:[%s169 + $0x20] sm:$0xff]
        %v213 = vld [vmem:[%s169 + $0x28] sm:$0xff]
        %v214 = vld [vmem:[%s169 + $0x30] sm:$0xff]
        %v215 = vld [vmem:[%s169 + $0x38] sm:$0xff]
        %v216 = vld [vmem:[%s169 + $0x40] sm:$0xff]
        %v217 = vld [vmem:[%s169 + $0x48] sm:$0xff]
        %v218 = vld [vmem:[%s169 + $0x50] sm:$0xff]
        %v219 = vld [vmem:[%s169 + $0x58] sm:$0xff]
        %v220 = vld [vmem:[%s169 + $0x60] sm:$0xff]
        %v221 = vld [vmem:[%s169 + $0x68] sm:$0xff]
        %v222 = vld [vmem:[%s169 + $0x70] sm:$0xff]
        %v223 = vld [vmem:[%s169 + $0x78] sm:$0xff]
        %v224 = vld [vmem:[%s179] sm:$0xff]
        %v225 = vld [vmem:[%s179 + $0x8] sm:$0xff]
        %v226 = vld [vmem:[%s179 + $0x10] sm:$0xff]
        %v227 = vld [vmem:[%s179 + $0x18] sm:$0xff]
        %v228 = vld [vmem:[%s179 + $0x20] sm:$0xff]
        %v229 = vld [vmem:[%s179 + $0x28] sm:$0xff]
        %v230 = vld [vmem:[%s179 + $0x30] sm:$0xff]
        %v231 = vld [vmem:[%s179 + $0x38] sm:$0xff]
        %v232 = vld [vmem:[%s179 + $0x40] sm:$0xff]
        %v233 = vld [vmem:[%s179 + $0x48] sm:$0xff]
        %v234 = vld [vmem:[%s179 + $0x50] sm:$0xff]
        %v235 = vld [vmem:[%s179 + $0x58] sm:$0xff]
        %v236 = vld [vmem:[%s179 + $0x60] sm:$0xff]
        %v237 = vld [vmem:[%s179 + $0x68] sm:$0xff]
        %v238 = vld [vmem:[%s179 + $0x70] sm:$0xff]
        %v239 = vld [vmem:[%s179 + $0x78] sm:$0xff]
        %v240 = vsub.f32 %v208, %v224
        %v241 = vsub.f32 %v209, %v225
        %v242 = vsub.f32 %v210, %v226
        %v243 = vsub.f32 %v211, %v227
        %v244 = vsub.f32 %v212, %v228
        %v245 = vsub.f32 %v213, %v229
        %v246 = vsub.f32 %v214, %v230
        %v247 = vsub.f32 %v215, %v231
        %v248 = vsub.f32 %v216, %v232
        %v249 = vsub.f32 %v217, %v233
        %v250 = vsub.f32 %v218, %v234
        %v251 = vsub.f32 %v219, %v235
        %v252 = vsub.f32 %v220, %v236
        %v253 = vsub.f32 %v221, %v237
        %v254 = vsub.f32 %v222, %v238
        %v255 = vsub.f32 %v223, %v239
        %v256 = vmul.f32 %v240, %v240
        %v257 = vmul.f32 %v241, %v241
        %v258 = vmul.f32 %v242, %v242
        %v259 = vmul.f32 %v243, %v243
        %v260 = vmul.f32 %v244, %v244
        %v261 = vmul.f32 %v245, %v245
        %v262 = vmul.f32 %v246, %v246
        %v263 = vmul.f32 %v247, %v247
        %v264 = vmul.f32 %v248, %v248
        %v265 = vmul.f32 %v249, %v249
        %v266 = vmul.f32 %v250, %v250
        %v267 = vmul.f32 %v251, %v251
        %v268 = vmul.f32 %v252, %v252
        %v269 = vmul.f32 %v253, %v253
        %v270 = vmul.f32 %v254, %v254
        %v271 = vmul.f32 %v255, %v255
        %v272 = vadd.f32 %v256, %v257
        %v273 = vadd.f32 %v272, %v258
        %v274 = vadd.f32 %v273, %v259
        %v275 = vadd.f32 %v274, %v260
        %v276 = vadd.f32 %v275, %v261
        %v277 = vadd.f32 %v276, %v262
        %v278 = vadd.f32 %v277, %v263
        %v279 = vadd.f32 %v278, %v264
        %v280 = vadd.f32 %v279, %v265
        %v281 = vadd.f32 %v280, %v266
        %v282 = vadd.f32 %v281, %v267
        %v283 = vadd.f32 %v282, %v268
        %v284 = vadd.f32 %v283, %v269
        %v285 = vadd.f32 %v284, %v270
        %v286 = vadd.f32 %v285, %v271
        %287 = vst [vmem:[%s205] sm:$0xff] %v286
        %s288 = sand.u32 %s82, 1
        %s289 = scalar_lea.sflag [#allocation4], %s288
        %s290 = sand.u32 %s82, 1
        %s291 = smul.addr %s290, 8
        %s292 = scalar_lea.vmem [#allocation7], %s291
        // Predicated region
        $region37: #{tpu_custom_call.1} parent=27 // pred_check
          %p293 = pneg %p92
        $region38: #{tpu_custom_call.1} parent=27 // pred_check_branch
          %295 = sbr.rel (%p293) target = $region40
        $region39: #{tpu_custom_call.1} parent=27 // pred_region
          %297 = vsyncadd %s289, 0
          %s298 = smul.addr %s22, 8
          %s299 = scalar_lea.hbm %s2, %s298
          %s301 = sshll.u32 %s292, 4
          %s302 = int_to_ptr.vmem [resolvable:$true] %s301
          %s303 = sshll.u32 %s299, 4
          %s304 = int_to_ptr.hbm [resolvable:$true] %s303
          %306 = dma.vmem_to_hbm [thread:$0]  %s302, 128, %s304, %s289
        $region40: #{tpu_custom_call.1} parent=27 // pred_fallthru
          _
      $region28: #{tpu_custom_call.1} parent=5 // pred_fallthru
        _
      %p307 = scmp.le.s32.totalorder 2, %s17
      // Predicated region
      $region41: #{tpu_custom_call.1} parent=5 // pred_check
        %p308 = pneg %p307
      $region42: #{tpu_custom_call.1} parent=5 // pred_check_branch
        %310 = sbr.rel (%p308) target = $region44
      $region43: #{tpu_custom_call.1} parent=5 // pred_region
        %s311 = ssub.s32 %s17, 2
        // Predicated region
        $region45: #{tpu_custom_call.1} parent=43 // pred_check
          %p312 = pneg %p98
        $region46: #{tpu_custom_call.1} parent=43 // pred_check_branch
          %314 = sbr.rel (%p312) target = $region48
        $region47: #{tpu_custom_call.1} parent=43 // pred_region
          %s315 = sand.u32 %s83, 1
          %s316 = scalar_lea.sflag [#allocation4], %s315
          %s317 = sand.u32 %s83, 1
          %s318 = smul.addr %s317, 8
          %s319 = scalar_lea.vmem [#allocation7], %s318
          %321 = dma.done %s316, 128
        $region48: #{tpu_custom_call.1} parent=43 // pred_fallthru
          _
      $region44: #{tpu_custom_call.1} parent=5 // pred_fallthru
        _
    $region6: #{tpu_custom_call.1} parent=1 // loop_footer
      %s21 = sadd.s32 1, %s17
    $region7: #{tpu_custom_call.1} parent=1 // loop_footer_branch
      %16 = sbr.rel target = $region3
    $region8: #{tpu_custom_call.1} parent=1 // loop_exit
      _
    %322 = vsyncpa [#allocation3], 1
    %s323 = scalar_lea.sflag [#allocation3], 1
    %324 = vsyncpa %s323, 1
    %325 = vsyncpa [#allocation6], 1
    %s326 = scalar_lea.sflag [#allocation6], 1
    %327 = vsyncpa %s326, 1
    %328 = vsyncpa [#allocation4], 1
    %s329 = scalar_lea.sflag [#allocation4], 1
    %330 = vsyncpa %s329, 1

</llo_original>
